<compile_context>
chip_gen: v6e
topology: v6e:2x2x1
jax: 0.10.0
libtpu: 0.0.40
codegen_flags: <defaults>
</compile_context>

<pallas_src>
import functools

import jax
import jax.numpy as jnp
import numpy as np
from jax import lax
from jax.experimental import pallas as pl
from jax.experimental.pallas import tpu as pltpu


def _round_up(x, m):
    return (x + m - 1) // m * m


def _vmem_limit(est_bytes):
    # generous headroom, but always below the v7x 64 MiB physical ceiling
    return int(min(56 * 2**20, max(16 * 2**20, 4 * est_bytes)))


# ----------------------------------------------------------------------------
# Streaming LSTM recurrence kernel: grid = (batch_blocks, S).
# Per step: gates = x_t @ W_ih + h @ W_hh + b  (bf16 MXU, f32 accumulate),
# elementwise activations on [i|f|o] and [g] slabs, h/c in persistent scratch.
# ----------------------------------------------------------------------------
def _lstm_step_kernel(x_ref, wih_ref, whh_ref, b_ref, h_all_ref,
                      h_scr, c_scr, *, hidden_p):
    Hp = hidden_p
    t = pl.program_id(1)

    @pl.when(t == 0)
    def _():
        h_scr[...] = jnp.zeros_like(h_scr)
        c_scr[...] = jnp.zeros_like(c_scr)

    x = x_ref[0]                                   # (Bb, E)  bf16
    h = h_scr[...]                                 # (Bb, Hp) f32

    gates = (jnp.dot(x, wih_ref[...], preferred_element_type=jnp.float32)
             + jnp.dot(h.astype(jnp.bfloat16), whh_ref[...],
                       preferred_element_type=jnp.float32)
             + b_ref[...])                         # (Bb, 4Hp) f32

    # gate layout is [i, f, o | g] (reordered at param-prep time)
    sig = jax.nn.sigmoid(gates[:, :3 * Hp])        # one wide EUP slab
    g_g = jnp.tanh(gates[:, 3 * Hp:])
    i_g = sig[:, 0 * Hp:1 * Hp]
    f_g = sig[:, 1 * Hp:2 * Hp]
    o_g = sig[:, 2 * Hp:3 * Hp]

    c_new = f_g * c_scr[...] + i_g * g_g
    h_new = o_g * jnp.tanh(c_new)

    c_scr[...] = c_new
    h_scr[...] = h_new
    h_all_ref[0] = h_new.astype(h_all_ref.dtype)


def lstm_recurrence_pallas(seq, w_ih, w_hh, b_gates, *, n_bblk, Bb, Hp):
    """seq: (S, Bp, E) bf16 -> h_all (S, Bp, Hp) bf16."""
    S, Bp, E = seq.shape
    G = 4 * Hp
    assert Bp == n_bblk * Bb

    est = (2 * (Bb * E * 2 + w_ih.nbytes + w_hh.nbytes + b_gates.nbytes
                + Bb * Hp * 2)
           + 2 * Bb * Hp * 4)

    kernel = functools.partial(_lstm_step_kernel, hidden_p=Hp)
    return pl.pallas_call(
        kernel,
        grid=(n_bblk, S),
        in_specs=[
            pl.BlockSpec((1, Bb, E), lambda b, t: (t, b, 0)),   # x_t slice
            pl.BlockSpec((E, G), lambda b, t: (0, 0)),          # W_ih (resident)
            pl.BlockSpec((Hp, G), lambda b, t: (0, 0)),         # W_hh (resident)
            pl.BlockSpec((1, G), lambda b, t: (0, 0)),          # bias (resident)
        ],
        out_specs=pl.BlockSpec((1, Bb, Hp), lambda b, t: (t, b, 0)),
        out_shape=jax.ShapeDtypeStruct((S, Bp, Hp), jnp.bfloat16),
        scratch_shapes=[pltpu.VMEM((Bb, Hp), jnp.float32),      # h (persists)
                        pltpu.VMEM((Bb, Hp), jnp.float32)],     # c (persists)
        compiler_params=pltpu.CompilerParams(
            dimension_semantics=("parallel", "arbitrary"),      # batch || , time seq
            vmem_limit_bytes=_vmem_limit(est)),
    )(seq, w_ih, w_hh, b_gates)


# ----------------------------------------------------------------------------
# Lane-dense matmul + bias kernel (used for the packed-row unembed).
# Weights / bias must be pre-padded (N multiple of 128).
# ----------------------------------------------------------------------------
def _matmul_bias_kernel(x_ref, w_ref, b_ref, o_ref):
    o_ref[...] = (jnp.dot(x_ref[...], w_ref[...],
                          preferred_element_type=jnp.float32)
                  + b_ref[...]).astype(o_ref.dtype)


def _pick_m_tile(M, tmax, unit=8):
    """Pad M only to a multiple of `unit` and pick a tile that divides it."""
    Mp = _round_up(M, unit)
    t = min(_round_up(min(tmax, Mp), unit), Mp)
    while Mp % t:
        t -= unit
    return Mp, t


def matmul_bias_pallas(x, w, b, *, tm=256, tn=512):
    """out = x @ w + b with f32 accumulation; w/b pre-padded to lane multiples."""
    M, K = x.shape
    Kw, N = w.shape
    assert Kw == K and N % 128 == 0 and b.shape == (1, N)

    Mp, tm = _pick_m_tile(M, tm)
    tn = min(tn, N)
    while N % tn:
        tn -= 128
    if Mp != M:
        x = jnp.pad(x, ((0, Mp - M), (0, 0)))

    est = 2 * (tm * K * x.dtype.itemsize + K * tn * w.dtype.itemsize
               + tn * 4 + tm * tn * 4)

    out = pl.pallas_call(
        _matmul_bias_kernel,
        grid=(Mp // tm, N // tn),
        in_specs=[
            pl.BlockSpec((tm, K), lambda i, j: (i, 0)),
            pl.BlockSpec((K, tn), lambda i, j: (0, j)),
            pl.BlockSpec((1, tn), lambda i, j: (0, j)),
        ],
        out_specs=pl.BlockSpec((tm, tn), lambda i, j: (i, j)),
        out_shape=jax.ShapeDtypeStruct((Mp, N), jnp.float32),
        compiler_params=pltpu.CompilerParams(
            dimension_semantics=("parallel", "parallel"),
            vmem_limit_bytes=_vmem_limit(est)),
    )(x, w, b)
    return out[:M]


# ----------------------------------------------------------------------------
# Parameter prep (done once): gate reorder [i,f,g,o] -> [i,f,o,g], pad each
# gate block H -> Hp (zeros keep padded hidden dims exactly zero), pad W_out /
# b_out to lane multiples, cast matmul weights to bf16 (biases stay f32).
# ----------------------------------------------------------------------------
def _reorder_pad_gates(w, H, Hp):
    lead = w.shape[:-1]
    w4 = w.reshape(lead + (4, H))
    w4 = w4[..., (0, 1, 3, 2), :]                      # [i,f,g,o] -> [i,f,o,g]
    w4 = jnp.pad(w4, [(0, 0)] * len(lead) + [(0, 0), (0, Hp - H)])
    return w4.reshape(lead + (4 * Hp,))


def prepare_padded_params(params, H, Hp):
    V = params["w_out_t"].shape[1]
    Vp = _round_up(V, 128)
    w_ih = _reorder_pad_gates(params["w_ih_t"], H, Hp).astype(jnp.bfloat16)
    w_hh = _reorder_pad_gates(params["w_hh_t"], H, Hp)
    w_hh = jnp.pad(w_hh, ((0, Hp - H), (0, 0))).astype(jnp.bfloat16)
    b_gates = _reorder_pad_gates(params["b_ih"] + params["b_hh"], H, Hp)   # f32
    w_out = jnp.pad(params["w_out_t"],
                    ((0, Hp - H), (0, Vp - V))).astype(jnp.bfloat16)
    b_out = jnp.pad(params["b_out"], ((0, 0), (0, Vp - V)))                # f32
    return dict(w_ih=w_ih, w_hh=w_hh, b_gates=b_gates,
                w_out=w_out, b_out=b_out, V=V, Vp=Vp)


# ----------------------------------------------------------------------------
# Packed-sequence row indices (pack_padded_sequence order, lengths sorted
# descending) built with vectorized jnp from a device lengths array.
# ----------------------------------------------------------------------------
def packed_row_indices(lengths_dev, S, Bp, total):
    B = lengths_dev.shape[0]
    t = jnp.arange(S, dtype=jnp.int32)[:, None]                  # (S,1)
    b = jnp.arange(B, dtype=jnp.int32)[None, :]                  # (1,B)
    valid = lengths_dev[None, :] > t                             # (S,B)
    batch_sizes = jnp.sum(valid, axis=1).astype(jnp.int32)       # (S,)
    offsets = jnp.concatenate(
        [jnp.zeros((1,), jnp.int32), jnp.cumsum(batch_sizes)[:-1].astype(jnp.int32)])
    pos = jnp.where(valid, offsets[:, None] + b, total)          # invalid -> dumped
    src = t * Bp + b                                             # row in (S*Bp, ...)
    row_src = jnp.zeros((total + 1,), jnp.int32).at[pos.ravel()].set(src.ravel())
    return row_src[:total]


# ----------------------------------------------------------------------------
# Christopher.forward equivalent (glue in plain JAX, hot paths in Pallas).
# ----------------------------------------------------------------------------
def christopher_forward(params, features, captions, lengths):
    """
    features: (B, E) float32   -- `itWasImplied`
    captions: (B, T) int32     -- token ids
    lengths : sequence[int]    -- valid lengths, sorted descending, <= T+1
    returns : (sum(lengths), vocab) logits on packed-sequence data
    """
    lengths_list = [int(x) for x in lengths]
    assert all(lengths_list[i] >= lengths_list[i + 1]
               for i in range(len(lengths_list) - 1)), "lengths must be sorted desc"
    total = sum(lengths_list)                        # static: defines output shape

    B, T = captions.shape
    E = features.shape[1]
    H = params["w_hh_t"].shape[0]
    S = T + 1
    assert max(lengths_list) <= S

    Hp = _round_up(H, 128)
    Bp0 = _round_up(B, 8)
    if Bp0 >= 16:                                    # v7x: one batch block per TC
        n_bblk = 2
        Bb = _round_up(Bp0 // 2, 8)
    else:
        n_bblk = 1
        Bb = Bp0
    Bp = Bb * n_bblk

    pp = prepare_padded_params(params, H, Hp)

    # Embedding lookup + concat + batch padding (plain-JAX glue), bf16 inputs.
    emb = params["embedding"][captions]                          # (B, T, E)
    seq = jnp.concatenate([features[:, None, :], emb], axis=1)   # (B, S, E)
    seq = jnp.transpose(seq, (1, 0, 2))                          # (S, B, E)
    seq = jnp.pad(seq, ((0, 0), (0, Bp - B), (0, 0))).astype(jnp.bfloat16)

    # Streaming LSTM recurrence (x@W_ih fused into the per-step grid kernel).
    h_all = lstm_recurrence_pallas(seq, pp["w_ih"], pp["w_hh"], pp["b_gates"],
                                   n_bblk=n_bblk, Bb=Bb, Hp=Hp)  # (S,Bp,Hp) bf16

    # Packed-row gather (PackedSequence .data order).
    lengths_dev = jnp.asarray(lengths_list, dtype=jnp.int32)
    row_src = packed_row_indices(lengths_dev, S, Bp, total)
    h_packed = h_all.reshape(S * Bp, Hp)[row_src]                # (total, Hp) bf16
    # TODO(synk): fuse this gather into the unembed kernel via scalar prefetch.

    # Unembed only the packed rows with one big lane-dense bf16 matmul.
    logits = matmul_bias_pallas(h_packed, pp["w_out"], pp["b_out"])
    return logits[:, :pp["V"]]


# ----------------------------------------------------------------------------
# Pure-JAX f32 reference (lax.scan LSTM, PyTorch gate order) for sanity check.
# ----------------------------------------------------------------------------
def _reference_logits(params, seq_tbe):
    H = params["w_hh_t"].shape[0]

    def step(carry, x):
        h, c = carry
        gates = (x @ params["w_ih_t"] + params["b_ih"]
                 + h @ params["w_hh_t"] + params["b_hh"])
        i = jax.nn.sigmoid(gates[:, 0 * H:1 * H])
        f = jax.nn.sigmoid(gates[:, 1 * H:2 * H])
        g = jnp.tanh(gates[:, 2 * H:3 * H])
        o = jax.nn.sigmoid(gates[:, 3 * H:4 * H])
        c = f * c + i * g
        h = o * jnp.tanh(c)
        return (h, c), h @ params["w_out_t"] + params["b_out"]

    B = seq_tbe.shape[1]
    init = (jnp.zeros((B, H), jnp.float32), jnp.zeros((B, H), jnp.float32))
    _, logits = lax.scan(step, init, seq_tbe)
    return logits


# ----------------------------------------------------------------------------
def init_params(key, vocab, embed, hidden):
    ks = jax.random.split(key, 7)
    s = 1.0 / np.sqrt(hidden)
    return {
        "embedding": jax.random.normal(ks[0], (vocab, embed), jnp.float32),
        # stored pre-transposed for x @ W^T form, PyTorch gate order [i,f,g,o]
        "w_ih_t": jax.random.uniform(ks[1], (embed, 4 * hidden), jnp.float32, -s, s),
        "w_hh_t": jax.random.uniform(ks[2], (hidden, 4 * hidden), jnp.float32, -s, s),
        "b_ih": jax.random.uniform(ks[3], (1, 4 * hidden), jnp.float32, -s, s),
        "b_hh": jax.random.uniform(ks[4], (1, 4 * hidden), jnp.float32, -s, s),
        "w_out_t": jax.random.uniform(ks[5], (hidden, vocab), jnp.float32, -s, s),
        "b_out": jax.random.uniform(ks[6], (1, vocab), jnp.float32, -s, s),
    }


if __name__ == "__main__":
    VOCAB = 48      # perfectScoreOnTheReadingSectionOfTheSAT
    EMBED = 32      # theMacauDevice
    HIDDEN = 32     # hideAndGoSeek
    B, T = 2, 7     # batch, caption length (sequence fed to LSTM is T+1 long)
    LENGTHS = [8, 5]  # sorted descending, <= T+1 (pack_padded_sequence contract)

    key = jax.random.PRNGKey(0)
    kp, kf, kc = jax.random.split(key, 3)
    params = init_params(kp, VOCAB, EMBED, HIDDEN)

    features = jax.random.normal(kf, (B, EMBED), jnp.float32)        # itWasImplied
    captions = jax.random.randint(kc, (B, T), 0, VOCAB, jnp.int32)   # captions

    out = christopher_forward(params, features, captions, LENGTHS)
    out = jax.block_until_ready(out)
    assert out.shape == (sum(LENGTHS), VOCAB), out.shape

    # sanity check vs pure-JAX f32 reference (kernel uses bf16 MXU operands,
    # so tolerance is loosened accordingly)
    seq = jnp.concatenate([features[:, None, :], params["embedding"][captions]], 1)
    ref_tbv = _reference_logits(params, jnp.transpose(seq, (1, 0, 2)))
    t_np = np.repeat(np.arange(max(LENGTHS)), len(LENGTHS)).reshape(-1, len(LENGTHS))
    b_np = np.tile(np.arange(len(LENGTHS)), (max(LENGTHS), 1))
    mask = np.asarray(LENGTHS)[None, :] > np.arange(max(LENGTHS))[:, None]
    ref = np.asarray(ref_tbv)[t_np[mask], b_np[mask], :]
    np.testing.assert_allclose(np.asarray(out), ref, rtol=5e-2, atol=5e-2)

    print("KERNEL_OK")
</pallas_src>

<mosaic_0001>
module attributes {stable_mosaic.version = 11 : i64} {
  func.func @_lstm_step_kernel(%arg0: i32, %arg1: i32, %arg2: memref<1x8x32xbf16, #tpu.memory_space<vmem>>, %arg3: memref<32x512xbf16, #tpu.memory_space<vmem>>, %arg4: memref<128x512xbf16, #tpu.memory_space<vmem>>, %arg5: memref<1x512xf32, #tpu.memory_space<vmem>>, %arg6: memref<1x8x128xbf16, #tpu.memory_space<vmem>>, %arg7: memref<8x128xf32, #tpu.memory_space<vmem>>, %arg8: memref<8x128xf32, #tpu.memory_space<vmem>>) attributes {dimension_semantics = [#tpu.dimension_semantics<parallel>, #tpu.dimension_semantics<arbitrary>], iteration_bounds = array<i64: 1, 8>, scalar_prefetch = 0 : i64, scratch_operands = 2 : i64, tpu.core_type = #tpu.core_type<tc>, window_params = [{transform_indices = @transform_0, window_bounds = array<i64: 1, 8, 32>}, {pipeline_mode = #tpu.pipeline_mode<synchronous>, transform_indices = @transform_1, window_bounds = array<i64: 32, 512>}, {pipeline_mode = #tpu.pipeline_mode<synchronous>, transform_indices = @transform_2, window_bounds = array<i64: 128, 512>}, {pipeline_mode = #tpu.pipeline_mode<synchronous>, transform_indices = @transform_3, window_bounds = array<i64: 1, 512>}, {transform_indices = @transform_4, window_bounds = array<i64: 1, 8, 128>}]} {
    %c0_i32 = arith.constant 0 : i32
    %0 = arith.cmpi eq, %arg1, %c0_i32 : i32
    %1 = arith.extui %0 : i1 to i32
    %c0_i32_0 = arith.constant 0 : i32
    %2 = arith.cmpi ne, %1, %c0_i32_0 : i32
    scf.if %2 {
      %cst_22 = arith.constant 0.000000e+00 : f32
      %38 = vector.broadcast %cst_22 : f32 to vector<8x128xf32>
      %c0_23 = arith.constant 0 : index
      %c0_24 = arith.constant 0 : index
      %39 = vector.load %arg7[%c0_23, %c0_24] : memref<8x128xf32, #tpu.memory_space<vmem>>, vector<8x128xf32>
      tpu.vector_store %arg7[%c0_23, %c0_24], %38 {strides = array<i32>} : memref<8x128xf32, #tpu.memory_space<vmem>>, vector<8x128xf32>,
      %cst_25 = arith.constant 0.000000e+00 : f32
      %40 = vector.broadcast %cst_25 : f32 to vector<8x128xf32>
      %c0_26 = arith.constant 0 : index
      %c0_27 = arith.constant 0 : index
      %41 = vector.load %arg8[%c0_26, %c0_27] : memref<8x128xf32, #tpu.memory_space<vmem>>, vector<8x128xf32>
      tpu.vector_store %arg8[%c0_26, %c0_27], %40 {strides = array<i32>} : memref<8x128xf32, #tpu.memory_space<vmem>>, vector<8x128xf32>,
    } else {
    }
    %c0 = arith.constant 0 : index
    %c0_1 = arith.constant 0 : index
    %c0_2 = arith.constant 0 : index
    %3 = vector.load %arg2[%c0, %c0_1, %c0_2] : memref<1x8x32xbf16, #tpu.memory_space<vmem>>, vector<1x8x32xbf16>
    %4 = vector.shape_cast %3 : vector<1x8x32xbf16> to vector<8x32xbf16>
    %c0_3 = arith.constant 0 : index
    %c0_4 = arith.constant 0 : index
    %5 = vector.load %arg7[%c0_3, %c0_4] : memref<8x128xf32, #tpu.memory_space<vmem>>, vector<8x128xf32>
    %c0_5 = arith.constant 0 : index
    %c0_6 = arith.constant 0 : index
    %6 = vector.load %arg3[%c0_5, %c0_6] : memref<32x512xbf16, #tpu.memory_space<vmem>>, vector<32x512xbf16>
    %cst = arith.constant dense<0.000000e+00> : vector<8x512xf32>
    %7 = tpu.matmul %4, %6, %cst {dimension_numbers = #tpu.dot_dimension_numbers<[1], [0], [0], [1], [0, 0, 1, 1], [], []>} : vector<8x32xbf16>, vector<32x512xbf16>, vector<8x512xf32> -> vector<8x512xf32>
    %8 = arith.truncf %5 : vector<8x128xf32> to vector<8x128xbf16>
    %c0_7 = arith.constant 0 : index
    %c0_8 = arith.constant 0 : index
    %9 = vector.load %arg4[%c0_7, %c0_8] : memref<128x512xbf16, #tpu.memory_space<vmem>>, vector<128x512xbf16>
    %cst_9 = arith.constant dense<0.000000e+00> : vector<8x512xf32>
    %10 = tpu.matmul %8, %9, %cst_9 {dimension_numbers = #tpu.dot_dimension_numbers<[1], [0], [0], [1], [0, 0, 1, 1], [], []>} : vector<8x128xbf16>, vector<128x512xbf16>, vector<8x512xf32> -> vector<8x512xf32>
    %11 = arith.addf %7, %10 : vector<8x512xf32>
    %c0_10 = arith.constant 0 : index
    %c0_11 = arith.constant 0 : index
    %12 = vector.load %arg5[%c0_10, %c0_11] : memref<1x512xf32, #tpu.memory_space<vmem>>, vector<1x512xf32>
    %13 = vector.broadcast %12 : vector<1x512xf32> to vector<8x512xf32>
    %14 = arith.addf %11, %13 : vector<8x512xf32>
    %15 = vector.extract_strided_slice %14 {offsets = [0, 0], sizes = [8, 384], strides = [1, 1]} : vector<8x512xf32> to vector<8x384xf32>
    %16 = arith.negf %15 : vector<8x384xf32>
    %17 = math.exp %16 : vector<8x384xf32>
    %cst_12 = arith.constant 1.000000e+00 : f32
    %18 = vector.broadcast %cst_12 : f32 to vector<8x384xf32>
    %19 = arith.addf %18, %17 : vector<8x384xf32>
    %20 = arith.divf %18, %19 : vector<8x384xf32>
    %21 = vector.extract_strided_slice %14 {offsets = [0, 384], sizes = [8, 128], strides = [1, 1]} : vector<8x512xf32> to vector<8x128xf32>
    %22 = math.tanh %21 : vector<8x128xf32>
    %23 = vector.extract_strided_slice %20 {offsets = [0, 0], sizes = [8, 128], strides = [1, 1]} : vector<8x384xf32> to vector<8x128xf32>
    %24 = vector.extract_strided_slice %20 {offsets = [0, 128], sizes = [8, 128], strides = [1, 1]} : vector<8x384xf32> to vector<8x128xf32>
    %25 = vector.extract_strided_slice %20 {offsets = [0, 256], sizes = [8, 128], strides = [1, 1]} : vector<8x384xf32> to vector<8x128xf32>
    %c0_13 = arith.constant 0 : index
    %c0_14 = arith.constant 0 : index
    %26 = vector.load %arg8[%c0_13, %c0_14] : memref<8x128xf32, #tpu.memory_space<vmem>>, vector<8x128xf32>
    %27 = arith.mulf %24, %26 : vector<8x128xf32>
    %28 = arith.mulf %23, %22 : vector<8x128xf32>
    %29 = arith.addf %27, %28 : vector<8x128xf32>
    %30 = math.tanh %29 : vector<8x128xf32>
    %31 = arith.mulf %25, %30 : vector<8x128xf32>
    %c0_15 = arith.constant 0 : index
    %c0_16 = arith.constant 0 : index
    %32 = vector.load %arg8[%c0_15, %c0_16] : memref<8x128xf32, #tpu.memory_space<vmem>>, vector<8x128xf32>
    tpu.vector_store %arg8[%c0_15, %c0_16], %29 {strides = array<i32>} : memref<8x128xf32, #tpu.memory_space<vmem>>, vector<8x128xf32>,
    %c0_17 = arith.constant 0 : index
    %c0_18 = arith.constant 0 : index
    %33 = vector.load %arg7[%c0_17, %c0_18] : memref<8x128xf32, #tpu.memory_space<vmem>>, vector<8x128xf32>
    tpu.vector_store %arg7[%c0_17, %c0_18], %31 {strides = array<i32>} : memref<8x128xf32, #tpu.memory_space<vmem>>, vector<8x128xf32>,
    %34 = arith.truncf %31 : vector<8x128xf32> to vector<8x128xbf16>
    %c0_19 = arith.constant 0 : index
    %c0_20 = arith.constant 0 : index
    %c0_21 = arith.constant 0 : index
    %35 = vector.load %arg6[%c0_19, %c0_20, %c0_21] : memref<1x8x128xbf16, #tpu.memory_space<vmem>>, vector<1x8x128xbf16>
    %36 = vector.shape_cast %35 : vector<1x8x128xbf16> to vector<8x128xbf16>
    %37 = vector.shape_cast %34 : vector<8x128xbf16> to vector<1x8x128xbf16>
    tpu.vector_store %arg6[%c0_19, %c0_20, %c0_21], %37 {strides = array<i32>} : memref<1x8x128xbf16, #tpu.memory_space<vmem>>, vector<1x8x128xbf16>,
    return
  }
  func.func @transform_0(%arg0: i32, %arg1: i32) -> (i32, i32, i32) {
    %c0_i32 = arith.constant 0 : i32
    %c0_i32_0 = arith.constant 0 : i32
    return %arg1, %arg0, %c0_i32 : i32, i32, i32
  }
  func.func @transform_1(%arg0: i32, %arg1: i32) -> (i32, i32) {
    %c0_i32 = arith.constant 0 : i32
    %c0_i32_0 = arith.constant 0 : i32
    %c0_i32_1 = arith.constant 0 : i32
    return %c0_i32, %c0_i32_0 : i32, i32
  }
  func.func @transform_2(%arg0: i32, %arg1: i32) -> (i32, i32) {
    %c0_i32 = arith.constant 0 : i32
    %c0_i32_0 = arith.constant 0 : i32
    %c0_i32_1 = arith.constant 0 : i32
    return %c0_i32, %c0_i32_0 : i32, i32
  }
  func.func @transform_3(%arg0: i32, %arg1: i32) -> (i32, i32) {
    %c0_i32 = arith.constant 0 : i32
    %c0_i32_0 = arith.constant 0 : i32
    %c0_i32_1 = arith.constant 0 : i32
    return %c0_i32, %c0_i32_0 : i32, i32
  }
  func.func @transform_4(%arg0: i32, %arg1: i32) -> (i32, i32, i32) {
    %c0_i32 = arith.constant 0 : i32
    %c0_i32_0 = arith.constant 0 : i32
    return %arg1, %arg0, %c0_i32 : i32, i32, i32
  }
}

</mosaic_0001>

<llo_original>
// kernel: tpu_custom_call.1
$region0: #{tpu_custom_call.1}
  #allocation0 [shape = 'u32[]', space=smem, size = 0x4, offset = 0x4, fixed_abs, tag = 'smem constant byte address 0x4 - core index']
  #allocation1 [shape = 'u32[144,128]{1,0:T(1,128)}', space=vmem, size = 0x12000, scoped, tag = 'internal scratch']
  #allocation2 [shape = 'f32[8,128]{1,0:T(8,128)}', space=vmem, size = 0x1000, scoped, tag = 'scratch operand']
  #allocation3 [shape = 'f32[8,128]{1,0:T(8,128)}', space=vmem, size = 0x1000, scoped, tag = 'scratch operand']
  %s0 = inlined_call_operand.hbm [shape: bf16[8,8,32], index: 0, kind: input, shape index: {}]
  %s1 = inlined_call_operand.hbm [shape: bf16[32,512], index: 1, kind: input, shape index: {}]
  %s2 = inlined_call_operand.hbm [shape: bf16[128,512], index: 2, kind: input, shape index: {}]
  %s3 = inlined_call_operand.vmem [shape: f32[1,512], index: 3, kind: input, shape index: {}]
  %s4 = inlined_call_operand.hbm [shape: bf16[8,8,128], index: 4, kind: output, shape index: {}]
  %s5 = sld [smem:[#allocation0]]
  $region65: #{tpu_custom_call.1} parent=0
    _
  %s7 = ssub.s32 1, %s5
  %s8 = scalar_select 0, %s7, %s5
  $region1: #{tpu_custom_call.1} parent=0
    #allocation4 [shape = 'u8[4096]{0}', space=vmem, size = 0x1000, scoped, tag = 'input window, operand 0']
    #allocation5 [shape = 's32[2]{0}', space=sflag, size = 0x8, scoped, tag = 'scoped memory for tpu_custom_call.1']
    #allocation6 [shape = 's32[2]{0}', space=sflag, size = 0x8, scoped, tag = 'scoped memory for tpu_custom_call.1']
    #allocation7 [shape = 'u8[32768]{0}', space=vmem, size = 0x8000, scoped, tag = 'input window, operand 1, single buffered']
    #allocation8 [shape = 's32[1]{0}', space=sflag, size = 0x4, scoped, tag = 'scoped memory for tpu_custom_call.1']
    #allocation9 [shape = 'u8[131072]{0}', space=vmem, size = 0x20000, scoped, tag = 'input window, operand 2, single buffered']
    #allocation10 [shape = 'u8[4096]{0}', space=vmem, size = 0x1000, scoped, tag = 'output window, operand 0']
    %9 = vsyncpa [#allocation5], 0
    %s10 = scalar_lea.sflag [#allocation5], 1
    %11 = vsyncpa %s10, 0
    %12 = vsyncpa [#allocation8], 0
    %13 = vsyncpa [#allocation6], 0
    %s14 = scalar_lea.sflag [#allocation6], 1
    %15 = vsyncpa %s14, 0
    loop: start=0, step=1, limit=10
    $region2: #{tpu_custom_call.1} parent=1 // loop_pre_header
      _
    $region3: #{tpu_custom_call.1} parent=1 // loop_header
      %s17 = sphi 0, %s21
      %p18 = scmp.ge.s32.totalorder %s17, 10
      %s24 = sphi 0, %s36
      %s25 = sphi 0, %s32
      %s26 = sphi 0, %s24
      %s27 = sphi 0, %s25
      %s28 = sphi 0, %s26
      %s29 = sphi 0, %s27
      %s41 = sphi 0, %s43
      %s44 = sphi 0, %s41
      %s45 = sphi 0, %s44
      %s61 = sphi 0, %s45
      %s65 = sphi 0, %s65
      %s67 = sphi 0, %s65
      %s68 = sphi 0, %s67
      %s82 = sphi 0, %s68
      %s86 = sphi 0, %s86
      %s88 = sphi 0, %s86
      %s89 = sphi 0, %s88
      %s103 = sphi 0, %s89
      %s107 = sphi 0, %s107
      %s109 = sphi 0, %s107
      %s110 = sphi 0, %s109
      %s124 = sphi 0, %s110
      %s132 = sphi 0, %s134
      %s135 = sphi 0, %s132
      %s136 = sphi 0, %s135
      %s152 = sphi 0, %s136
    $region4: #{tpu_custom_call.1} parent=1 // loop_header_branch
      %20 = sbr.rel (%p18) target = $region8
    $region5: #{tpu_custom_call.1} parent=1 // loop_body
      %s22 = ssub.s32 %s17, 1
      %s23 = ssub.s32 %s17, 2
      %s30 = sadd.s32 1, %s25
      %p31 = scmp.ge.s32.totalorder %s30, 8
      %s32 = scalar_select %p31, 0, %s30
      %s33 = sadd.s32 1, %s24
      %s34 = scalar_select %p31, %s33, %s24
      %p35 = scmp.ge.s32.totalorder %s34, 1
      %s36 = scalar_select %p35, 0, %s34
      %s37 = ssub.s32 %s25, %s32
      %s38 = ssub.s32 %s24, %s36
      %s39 = sor.u32 %s37, %s38
      %p40 = scmp.eq.s32.totalorder %s39, 0
      %s42 = sadd.s32 %s41, 1
      %s43 = scalar_select %p40, %s41, %s42
      %p46 = pneg %p40
      %p47 = scmp.eq.s32.totalorder %s17, 7
      %p48 = por %p46, %p47
      %p49 = scmp.ne.s32.totalorder %s41, %s44
      %p50 = scmp.eq.s32.totalorder %s17, 0
      %p51 = por %p49, %p50
      %p52 = scmp.ne.s32.totalorder %s41, %s44
      %p53 = scmp.eq.s32.totalorder %s22, 7
      %p54 = por %p52, %p53
      %p55 = scmp.ne.s32.totalorder %s44, %s45
      %p56 = scmp.eq.s32.totalorder %s22, 0
      %p57 = por %p55, %p56
      %p58 = scmp.ne.s32.totalorder %s44, %s45
      %p59 = scmp.eq.s32.totalorder %s23, 7
      %p60 = por %p58, %p59
      %p62 = scmp.ne.s32.totalorder %s45, %s61
      %p63 = scmp.eq.s32.totalorder %s23, 0
      %p64 = por %p62, %p63
      %s66 = sadd.s32 %s65, 1
      %p69 = scmp.eq.s32.totalorder %s17, 7
      %p70 = scmp.ne.s32.totalorder %s65, %s67
      %p71 = scmp.eq.s32.totalorder %s17, 0
      %p72 = por %p70, %p71
      %p73 = scmp.ne.s32.totalorder %s65, %s67
      %p74 = scmp.eq.s32.totalorder %s22, 7
      %p75 = por %p73, %p74
      %p76 = scmp.ne.s32.totalorder %s67, %s68
      %p77 = scmp.eq.s32.totalorder %s22, 0
      %p78 = por %p76, %p77
      %p79 = scmp.ne.s32.totalorder %s67, %s68
      %p80 = scmp.eq.s32.totalorder %s23, 7
      %p81 = por %p79, %p80
      %p83 = scmp.ne.s32.totalorder %s68, %s82
      %p84 = scmp.eq.s32.totalorder %s23, 0
      %p85 = por %p83, %p84
      %s87 = sadd.s32 %s86, 1
      %p90 = scmp.eq.s32.totalorder %s17, 7
      %p91 = scmp.ne.s32.totalorder %s86, %s88
      %p92 = scmp.eq.s32.totalorder %s17, 0
      %p93 = por %p91, %p92
      %p94 = scmp.ne.s32.totalorder %s86, %s88
      %p95 = scmp.eq.s32.totalorder %s22, 7
      %p96 = por %p94, %p95
      %p97 = scmp.ne.s32.totalorder %s88, %s89
      %p98 = scmp.eq.s32.totalorder %s22, 0
      %p99 = por %p97, %p98
      %p100 = scmp.ne.s32.totalorder %s88, %s89
      %p101 = scmp.eq.s32.totalorder %s23, 7
      %p102 = por %p100, %p101
      %p104 = scmp.ne.s32.totalorder %s89, %s103
      %p105 = scmp.eq.s32.totalorder %s23, 0
      %p106 = por %p104, %p105
      %s108 = sadd.s32 %s107, 1
      %p111 = scmp.eq.s32.totalorder %s17, 7
      %p112 = scmp.ne.s32.totalorder %s107, %s109
      %p113 = scmp.eq.s32.totalorder %s17, 0
      %p114 = por %p112, %p113
      %p115 = scmp.ne.s32.totalorder %s107, %s109
      %p116 = scmp.eq.s32.totalorder %s22, 7
      %p117 = por %p115, %p116
      %p118 = scmp.ne.s32.totalorder %s109, %s110
      %p119 = scmp.eq.s32.totalorder %s22, 0
      %p120 = por %p118, %p119
      %p121 = scmp.ne.s32.totalorder %s109, %s110
      %p122 = scmp.eq.s32.totalorder %s23, 7
      %p123 = por %p121, %p122
      %p125 = scmp.ne.s32.totalorder %s110, %s124
      %p126 = scmp.eq.s32.totalorder %s23, 0
      %p127 = por %p125, %p126
      %s128 = ssub.s32 %s25, %s32
      %s129 = ssub.s32 %s24, %s36
      %s130 = sor.u32 %s128, %s129
      %p131 = scmp.eq.s32.totalorder %s130, 0
      %s133 = sadd.s32 %s132, 1
      %s134 = scalar_select %p131, %s132, %s133
      %p137 = pneg %p131
      %p138 = scmp.eq.s32.totalorder %s17, 7
      %p139 = por %p137, %p138
      %p140 = scmp.ne.s32.totalorder %s132, %s135
      %p141 = scmp.eq.s32.totalorder %s17, 0
      %p142 = por %p140, %p141
      %p143 = scmp.ne.s32.totalorder %s132, %s135
      %p144 = scmp.eq.s32.totalorder %s22, 7
      %p145 = por %p143, %p144
      %p146 = scmp.ne.s32.totalorder %s135, %s136
      %p147 = scmp.eq.s32.totalorder %s22, 0
      %p148 = por %p146, %p147
      %p149 = scmp.ne.s32.totalorder %s135, %s136
      %p150 = scmp.eq.s32.totalorder %s23, 7
      %p151 = por %p149, %p150
      %p153 = scmp.ne.s32.totalorder %s136, %s152
      %p154 = scmp.eq.s32.totalorder %s23, 0
      %p155 = por %p153, %p154
      %p156 = scmp.le.s32.totalorder 1, %s17
      %p157 = scmp.lt.s32.totalorder %s17, 9
      %p158 = pnand %p156, %p157
      %p159 = pneg %p158
      // Predicated region
      $region9: #{tpu_custom_call.1} parent=5 // pred_check
        _
      $region10: #{tpu_custom_call.1} parent=5 // pred_check_branch
        %161 = sbr.rel (%p158) target = $region12
      $region11: #{tpu_custom_call.1} parent=5 // pred_region
        %s162 = ssub.s32 %s17, 1
        // Predicated region
        $region13: #{tpu_custom_call.1} parent=11 // pred_check
          %p163 = pneg %p78
        $region14: #{tpu_custom_call.1} parent=11 // pred_check_branch
          %165 = sbr.rel (%p163) target = $region16
        $region15: #{tpu_custom_call.1} parent=11 // pred_region
          %s167 = ssub.s32 1024, 1024
          %168 = vsyncadd [#allocation8], %s167
          %s169 = sshll.u32 [#allocation7], 4
          %s170 = int_to_ptr.vmem [resolvable:$true] %s169
          %175 = dma.hbm_to_vmem [thread:$0]  %s1, 1024, %s170, [#allocation8], 256, 256, 16
        $region16: #{tpu_custom_call.1} parent=11 // pred_fallthru
          _
        // Predicated region
        $region17: #{tpu_custom_call.1} parent=11 // pred_check
          %p176 = pneg %p99
        $region18: #{tpu_custom_call.1} parent=11 // pred_check_branch
          %178 = sbr.rel (%p176) target = $region20
        $region19: #{tpu_custom_call.1} parent=11 // pred_region
          %s180 = ssub.s32 4096, 4096
          %181 = vsyncadd [#allocation8], %s180
          %s182 = sshll.u32 [#allocation9], 4
          %s183 = int_to_ptr.vmem [resolvable:$true] %s182
          %188 = dma.hbm_to_vmem [thread:$0]  %s2, 4096, %s183, [#allocation8], 256, 256, 16
        $region20: #{tpu_custom_call.1} parent=11 // pred_fallthru
          _
        // Predicated region
        $region21: #{tpu_custom_call.1} parent=11 // pred_check
          %p189 = pneg %p120
        $region22: #{tpu_custom_call.1} parent=11 // pred_check_branch
          %191 = sbr.rel (%p189) target = $region24
        $region23: #{tpu_custom_call.1} parent=11 // pred_region
          _
        $region24: #{tpu_custom_call.1} parent=11 // pred_fallthru
          _
      $region12: #{tpu_custom_call.1} parent=5 // pred_fallthru
        _
      %p192 = scmp.lt.s32.totalorder %s17, 8
      // Predicated region
      $region25: #{tpu_custom_call.1} parent=5 // pred_check
        %p193 = pneg %p192
      $region26: #{tpu_custom_call.1} parent=5 // pred_check_branch
        %195 = sbr.rel (%p193) target = $region28
      $region27: #{tpu_custom_call.1} parent=5 // pred_region
        // Predicated region
        $region29: #{tpu_custom_call.1} parent=27 // pred_check
          %p196 = pneg %p51
        $region30: #{tpu_custom_call.1} parent=27 // pred_check_branch
          %198 = sbr.rel (%p196) target = $region32
        $region31: #{tpu_custom_call.1} parent=27 // pred_region
          %s199 = sand.u32 %s41, 1
          %s200 = scalar_lea.sflag [#allocation5], %s199
          %s201 = sand.u32 %s41, 1
          %s202 = smul.addr %s201, 4
          %s203 = scalar_lea.vmem [#allocation4], %s202
          %s205 = ssub.s32 64, 64
          %206 = vsyncadd %s200, %s205
          %s207 = sadd.s32 %s24, %s25
          %s208 = smul.addr %s207, 64
          %s209 = scalar_lea.hbm %s0, %s208
          %s211 = sshll.u32 %s203, 4
          %s212 = int_to_ptr.vmem [resolvable:$true] %s211
          %214 = dma.hbm_to_vmem [thread:$0]  %s209, 64, %s212, %s200
        $region32: #{tpu_custom_call.1} parent=27 // pred_fallthru
          _
      $region28: #{tpu_custom_call.1} parent=5 // pred_fallthru
        _
      %p215 = scmp.le.s32.totalorder 1, %s17
      %p216 = scmp.lt.s32.totalorder %s17, 9
      %p217 = pnand %p215, %p216
      %p218 = pneg %p217
      // Predicated region
      $region33: #{tpu_custom_call.1} parent=5 // pred_check
        _
      $region34: #{tpu_custom_call.1} parent=5 // pred_check_branch
        %220 = sbr.rel (%p217) target = $region36
      $region35: #{tpu_custom_call.1} parent=5 // pred_region
        %s221 = ssub.s32 %s17, 1
        %s222 = sand.u32 %s44, 1
        %s223 = scalar_lea.sflag [#allocation5], %s222
        %s224 = sand.u32 %s44, 1
        %s225 = smul.addr %s224, 4
        %s226 = scalar_lea.vmem [#allocation4], %s225
        // Predicated region
        $region37: #{tpu_custom_call.1} parent=35 // pred_check
          %p227 = pneg %p57
        $region38: #{tpu_custom_call.1} parent=35 // pred_check_branch
          %229 = sbr.rel (%p227) target = $region40
        $region39: #{tpu_custom_call.1} parent=35 // pred_region
          %230 = dma.done %s223, 64
        $region40: #{tpu_custom_call.1} parent=35 // pred_fallthru
          _
        // Predicated region
        $region41: #{tpu_custom_call.1} parent=35 // pred_check
          %p231 = pneg %p78
        $region42: #{tpu_custom_call.1} parent=35 // pred_check_branch
          %233 = sbr.rel (%p231) target = $region44
        $region43: #{tpu_custom_call.1} parent=35 // pred_region
          %234 = dma.done [#allocation8], 1024
        $region44: #{tpu_custom_call.1} parent=35 // pred_fallthru
          _
        // Predicated region
        $region45: #{tpu_custom_call.1} parent=35 // pred_check
          %p235 = pneg %p99
        $region46: #{tpu_custom_call.1} parent=35 // pred_check_branch
          %237 = sbr.rel (%p235) target = $region48
        $region47: #{tpu_custom_call.1} parent=35 // pred_region
          %238 = dma.done [#allocation8], 4096
        $region48: #{tpu_custom_call.1} parent=35 // pred_fallthru
          _
        %s239 = sand.u32 %s44, 1
        %s240 = scalar_lea.sflag [#allocation5], %s239
        %s241 = sand.u32 %s44, 1
        %s242 = smul.addr %s241, 4
        %s243 = scalar_lea.vmem [#allocation4], %s242
        %p244 = pneg %p57
        %p245 = pneg %p54
        %p246 = pneg %p78
        %p247 = pneg %p75
        %p248 = pneg %p99
        %p249 = pneg %p96
        %p250 = pneg %p120
        %p251 = pneg %p117
        %p252 = pneg %p148
        %p253 = pneg %p145
        %s254 = sand.u32 %s135, 1
        %s255 = scalar_lea.sflag [#allocation6], %s254
        %s256 = sand.u32 %s135, 1
        %s257 = smul.addr %s256, 4
        %s258 = scalar_lea.vmem [#allocation10], %s257
        %p260 = scmp.eq.s32.totalorder %s27, 0
        // Predicated region
        $region49: #{tpu_custom_call.1} parent=35 // pred_check
          %p261 = pneg %p260
        $region50: #{tpu_custom_call.1} parent=35 // pred_check_branch
          %263 = sbr.rel (%p261) target = $region52
        $region51: #{tpu_custom_call.1} parent=35 // pred_region
          %264 = vst [vmem:[#allocation2] sm:$0xff] 0.0
          %265 = vst [vmem:[#allocation3] sm:$0xff] 0.0
        $region52: #{tpu_custom_call.1} parent=35 // pred_fallthru
          _
        %v266 = vld [vmem:[%s226] sm:$0xf]
        %v267 = vld [vmem:[#allocation2] sm:$0xff]
        %v268 = vld [vmem:[#allocation7] sm:$0xff]
        %v269 = vld [vmem:[#allocation7 + $0x8] sm:$0xff]
        %v270 = vld [vmem:[#allocation7 + $0x10] sm:$0xff]
        %v271 = vld [vmem:[#allocation7 + $0x18] sm:$0xff]
        %v272 = vld [vmem:[#allocation7 + $0x20] sm:$0xff]
        %v273 = vld [vmem:[#allocation7 + $0x28] sm:$0xff]
        %v274 = vld [vmem:[#allocation7 + $0x30] sm:$0xff]
        %v275 = vld [vmem:[#allocation7 + $0x38] sm:$0xff]
        %v276 = vpack.c.bf16 %v267, %v267
        %v277 = vld [vmem:[#allocation9] sm:$0xff]
        %v278 = vld [vmem:[#allocation9 + $0x8] sm:$0xff]
        %v279 = vld [vmem:[#allocation9 + $0x10] sm:$0xff]
        %v280 = vld [vmem:[#allocation9 + $0x18] sm:$0xff]
        %v281 = vld [vmem:[#allocation9 + $0x20] sm:$0xff]
        %v282 = vld [vmem:[#allocation9 + $0x28] sm:$0xff]
        %v283 = vld [vmem:[#allocation9 + $0x30] sm:$0xff]
        %v284 = vld [vmem:[#allocation9 + $0x38] sm:$0xff]
        %v285 = vld [vmem:[#allocation9 + $0x40] sm:$0xff]
        %v286 = vld [vmem:[#allocation9 + $0x48] sm:$0xff]
        %v287 = vld [vmem:[#allocation9 + $0x50] sm:$0xff]
        %v288 = vld [vmem:[#allocation9 + $0x58] sm:$0xff]
        %v289 = vld [vmem:[#allocation9 + $0x60] sm:$0xff]
        %v290 = vld [vmem:[#allocation9 + $0x68] sm:$0xff]
        %v291 = vld [vmem:[#allocation9 + $0x70] sm:$0xff]
        %v292 = vld [vmem:[#allocation9 + $0x78] sm:$0xff]
        %v293 = vld [vmem:[#allocation9 + $0x80] sm:$0xff]
        %v294 = vld [vmem:[#allocation9 + $0x88] sm:$0xff]
        %v295 = vld [vmem:[#allocation9 + $0x90] sm:$0xff]
        %v296 = vld [vmem:[#allocation9 + $0x98] sm:$0xff]
        %v297 = vld [vmem:[#allocation9 + $0xa0] sm:$0xff]
        %v298 = vld [vmem:[#allocation9 + $0xa8] sm:$0xff]
        %v299 = vld [vmem:[#allocation9 + $0xb0] sm:$0xff]
        %v300 = vld [vmem:[#allocation9 + $0xb8] sm:$0xff]
        %v301 = vld [vmem:[#allocation9 + $0xc0] sm:$0xff]
        %v302 = vld [vmem:[#allocation9 + $0xc8] sm:$0xff]
        %v303 = vld [vmem:[#allocation9 + $0xd0] sm:$0xff]
        %v304 = vld [vmem:[#allocation9 + $0xd8] sm:$0xff]
        %v305 = vld [vmem:[#allocation9 + $0xe0] sm:$0xff]
        %v306 = vld [vmem:[#allocation9 + $0xe8] sm:$0xff]
        %v307 = vld [vmem:[#allocation9 + $0xf0] sm:$0xff]
        %v308 = vld [vmem:[#allocation9 + $0xf8] sm:$0xff]
        %v341 = vunpack.c.l.b16 %v277
        %v342 = vunpack.c.h.b16 %v277
        %v343 = vunpack.c.l.b16 %v278
        %v344 = vunpack.c.h.b16 %v278
        %v345 = vunpack.c.l.b16 %v279
        %v346 = vunpack.c.h.b16 %v279
        %v347 = vunpack.c.l.b16 %v280
        %v348 = vunpack.c.h.b16 %v280
        %v349 = vunpack.c.l.b16 %v281
        %v350 = vunpack.c.h.b16 %v281
        %v351 = vunpack.c.l.b16 %v282
        %v352 = vunpack.c.h.b16 %v282
        %v353 = vunpack.c.l.b16 %v283
        %v354 = vunpack.c.h.b16 %v283
        %v355 = vunpack.c.l.b16 %v284
        %v356 = vunpack.c.h.b16 %v284
        %v357 = vunpack.c.l.b16 %v285
        %v358 = vunpack.c.h.b16 %v285
        %v359 = vunpack.c.l.b16 %v286
        %v360 = vunpack.c.h.b16 %v286
        %v361 = vunpack.c.l.b16 %v287
        %v362 = vunpack.c.h.b16 %v287
        %v363 = vunpack.c.l.b16 %v288
        %v364 = vunpack.c.h.b16 %v288
        %v365 = vunpack.c.l.b16 %v289
        %v366 = vunpack.c.h.b16 %v289
        %v367 = vunpack.c.l.b16 %v290
        %v368 = vunpack.c.h.b16 %v290
        %v369 = vunpack.c.l.b16 %v291
        %v370 = vunpack.c.h.b16 %v291
        %v371 = vunpack.c.l.b16 %v292
        %v372 = vunpack.c.h.b16 %v292
        %v373 = vunpack.c.l.b16 %v293
        %v374 = vunpack.c.h.b16 %v293
        %v375 = vunpack.c.l.b16 %v294
        %v376 = vunpack.c.h.b16 %v294
        %v377 = vunpack.c.l.b16 %v295
        %v378 = vunpack.c.h.b16 %v295
        %v379 = vunpack.c.l.b16 %v296
        %v380 = vunpack.c.h.b16 %v296
        %v381 = vunpack.c.l.b16 %v297
        %v382 = vunpack.c.h.b16 %v297
        %v383 = vunpack.c.l.b16 %v298
        %v384 = vunpack.c.h.b16 %v298
        %v385 = vunpack.c.l.b16 %v299
        %v386 = vunpack.c.h.b16 %v299
        %v387 = vunpack.c.l.b16 %v300
        %v388 = vunpack.c.h.b16 %v300
        %v389 = vunpack.c.l.b16 %v301
        %v390 = vunpack.c.h.b16 %v301
        %v391 = vunpack.c.l.b16 %v302
        %v392 = vunpack.c.h.b16 %v302
        %v393 = vunpack.c.l.b16 %v303
        %v394 = vunpack.c.h.b16 %v303
        %v395 = vunpack.c.l.b16 %v304
        %v396 = vunpack.c.h.b16 %v304
        %v397 = vunpack.c.l.b16 %v305
        %v398 = vunpack.c.h.b16 %v305
        %v399 = vunpack.c.l.b16 %v306
        %v400 = vunpack.c.h.b16 %v306
        %v401 = vunpack.c.l.b16 %v307
        %v402 = vunpack.c.h.b16 %v307
        %v403 = vunpack.c.l.b16 %v308
        %v404 = vunpack.c.h.b16 %v308
        %v405 = vpack.c.b16 %v345, %v341
        %v406 = vpack.c.b16 %v346, %v342
        %v407 = vpack.c.b16 %v347, %v343
        %v408 = vpack.c.b16 %v348, %v344
        %v409 = vpack.c.b16 %v353, %v349
        %v410 = vpack.c.b16 %v354, %v350
        %v411 = vpack.c.b16 %v355, %v351
        %v412 = vpack.c.b16 %v356, %v352
        %v413 = vpack.c.b16 %v361, %v357
        %v414 = vpack.c.b16 %v362, %v358
        %v415 = vpack.c.b16 %v363, %v359
        %v416 = vpack.c.b16 %v364, %v360
        %v417 = vpack.c.b16 %v369, %v365
        %v418 = vpack.c.b16 %v370, %v366
        %v419 = vpack.c.b16 %v371, %v367
        %v420 = vpack.c.b16 %v372, %v368
        %v421 = vpack.c.b16 %v377, %v373
        %v422 = vpack.c.b16 %v378, %v374
        %v423 = vpack.c.b16 %v379, %v375
        %v424 = vpack.c.b16 %v380, %v376
        %v425 = vpack.c.b16 %v385, %v381
        %v426 = vpack.c.b16 %v386, %v382
        %v427 = vpack.c.b16 %v387, %v383
        %v428 = vpack.c.b16 %v388, %v384
        %v429 = vpack.c.b16 %v393, %v389
        %v430 = vpack.c.b16 %v394, %v390
        %v431 = vpack.c.b16 %v395, %v391
        %v432 = vpack.c.b16 %v396, %v392
        %v433 = vpack.c.b16 %v401, %v397
        %v434 = vpack.c.b16 %v402, %v398
        %v435 = vpack.c.b16 %v403, %v399
        %v436 = vpack.c.b16 %v404, %v400
        %469 = vmatprep.subr.bf16.mxu0 %v434
        %470 = vmatpush1.bf16.msra.mxu0 %v433
        %471 = vmatprep.subr.bf16.mxu0 %v430
        %472 = vmatpush1.bf16.msra.mxu0 %v429
        %473 = vmatprep.subr.bf16.mxu0 %v426
        %474 = vmatpush1.bf16.msra.mxu0 %v425
        %475 = vmatprep.subr.bf16.mxu0 %v422
        %476 = vmatpush1.bf16.msra.mxu0 %v421
        %477 = vmatprep.subr.bf16.mxu0 %v418
        %478 = vmatpush1.bf16.msra.mxu0 %v417
        %479 = vmatprep.subr.bf16.mxu0 %v414
        %480 = vmatpush1.bf16.msra.mxu0 %v413
        %481 = vmatprep.subr.bf16.mxu0 %v410
        %482 = vmatpush1.bf16.msra.mxu0 %v409
        %483 = vmatprep.subr.bf16.mxu0 %v406
        %484 = vmatpush1.bf16.msra.mxu0 %v405
        %485 = vmatprep.subr.bf16.mxu0 0
        %486 = vmatpush2.bf16.msra.mxu0 0
        %487 = vmatprep.subr.bf16.mxu0 0
        %488 = vmatpush2.bf16.msra.mxu0 0
        %489 = vmatprep.subr.bf16.mxu0 0
        %490 = vmatpush2.bf16.msra.mxu0 0
        %491 = vmatprep.subr.bf16.mxu0 0
        %492 = vmatpush2.bf16.msra.mxu0 0
        %493 = vmatprep.subr.bf16.mxu0 0
        %494 = vmatpush2.bf16.msra.mxu0 0
        %495 = vmatprep.subr.bf16.mxu0 0
        %496 = vmatpush2.bf16.msra.mxu0 0
        %497 = vmatprep.subr.bf16.mxu0 0
        %498 = vmatpush2.bf16.msra.mxu0 0
        %499 = vmatprep.subr.bf16.mxu0 0
        %500 = vmatpush2.bf16.msra.mxu0 0
        %501 = vmatprep.mubr.bf16.mxu0 0
        %502 = vmatmul.mubr.bf16.gmra.mxu0 %v276
        %v503 = vpop.f32.mrf.mxu0
        %v504 = vadd.f32 0.0, %v503
        %v505 = vpop.f32.mrf.mxu0
        %v506 = vadd.f32 0.0, %v505
        %v507 = vpop.f32.mrf.mxu0
        %v508 = vpop.f32.mrf.mxu0
        %509 = vdwg.mxu0
        %510 = vmatprep.subr.bf16.mxu0 %v436
        %511 = vmatpush1.bf16.msra.mxu0 %v435
        %512 = vmatprep.subr.bf16.mxu0 %v432
        %513 = vmatpush1.bf16.msra.mxu0 %v431
        %514 = vmatprep.subr.bf16.mxu0 %v428
        %515 = vmatpush1.bf16.msra.mxu0 %v427
        %516 = vmatprep.subr.bf16.mxu0 %v424
        %517 = vmatpush1.bf16.msra.mxu0 %v423
        %518 = vmatprep.subr.bf16.mxu0 %v420
        %519 = vmatpush1.bf16.msra.mxu0 %v419
        %520 = vmatprep.subr.bf16.mxu0 %v416
        %521 = vmatpush1.bf16.msra.mxu0 %v415
        %522 = vmatprep.subr.bf16.mxu0 %v412
        %523 = vmatpush1.bf16.msra.mxu0 %v411
        %524 = vmatprep.subr.bf16.mxu0 %v408
        %525 = vmatpush1.bf16.msra.mxu0 %v407
        %526 = vmatprep.subr.bf16.mxu0 0
        %527 = vmatpush2.bf16.msra.mxu0 0
        %528 = vmatprep.subr.bf16.mxu0 0
        %529 = vmatpush2.bf16.msra.mxu0 0
        %530 = vmatprep.subr.bf16.mxu0 0
        %531 = vmatpush2.bf16.msra.mxu0 0
        %532 = vmatprep.subr.bf16.mxu0 0
        %533 = vmatpush2.bf16.msra.mxu0 0
        %534 = vmatprep.subr.bf16.mxu0 0
        %535 = vmatpush2.bf16.msra.mxu0 0
        %536 = vmatprep.subr.bf16.mxu0 0
        %537 = vmatpush2.bf16.msra.mxu0 0
        %538 = vmatprep.subr.bf16.mxu0 0
        %539 = vmatpush2.bf16.msra.mxu0 0
        %540 = vmatprep.subr.bf16.mxu0 0
        %541 = vmatpush2.bf16.msra.mxu0 0
        %542 = vmatprep.mubr.bf16.mxu0 0
        %543 = vmatmul.mubr.bf16.gmra.mxu0 %v276
        %v544 = vpop.f32.mrf.mxu0
        %v545 = vadd.f32 0.0, %v544
        %v546 = vpop.f32.mrf.mxu0
        %v547 = vadd.f32 0.0, %v546
        %v548 = vpop.f32.mrf.mxu0
        %v549 = vpop.f32.mrf.mxu0
        %550 = vdwg.mxu0
        %v559 = vunpack.c.l.b16 %v268
        %v560 = vunpack.c.h.b16 %v268
        %v561 = vunpack.c.l.b16 %v269
        %v562 = vunpack.c.h.b16 %v269
        %v563 = vunpack.c.l.b16 %v270
        %v564 = vunpack.c.h.b16 %v270
        %v565 = vunpack.c.l.b16 %v271
        %v566 = vunpack.c.h.b16 %v271
        %v567 = vunpack.c.l.b16 %v272
        %v568 = vunpack.c.h.b16 %v272
        %v569 = vunpack.c.l.b16 %v273
        %v570 = vunpack.c.h.b16 %v273
        %v571 = vunpack.c.l.b16 %v274
        %v572 = vunpack.c.h.b16 %v274
        %v573 = vunpack.c.l.b16 %v275
        %v574 = vunpack.c.h.b16 %v275
        %v575 = vpack.c.b16 %v563, %v559
        %v576 = vpack.c.b16 %v564, %v560
        %v577 = vpack.c.b16 %v565, %v561
        %v578 = vpack.c.b16 %v566, %v562
        %v579 = vpack.c.b16 %v571, %v567
        %v580 = vpack.c.b16 %v572, %v568
        %v581 = vpack.c.b16 %v573, %v569
        %v582 = vpack.c.b16 %v574, %v570
        %vm591 = vcmask 261120
        %v593 = vsel %vm591, %v266, 0
        %595 = vmatprep.subr.bf16.mxu0 0
        %596 = vmatpush1.bf16.msra.mxu0 0
        %597 = vmatprep.subr.bf16.mxu0 0
        %598 = vmatpush1.bf16.msra.mxu0 0
        %599 = vmatprep.subr.bf16.mxu0 0
        %600 = vmatpush1.bf16.msra.mxu0 0
        %601 = vmatprep.subr.bf16.mxu0 0
        %602 = vmatpush1.bf16.msra.mxu0 0
        %603 = vmatprep.subr.bf16.mxu0 0
        %604 = vmatpush1.bf16.msra.mxu0 0
        %605 = vmatprep.subr.bf16.mxu0 0
        %606 = vmatpush1.bf16.msra.mxu0 0
        %607 = vmatprep.subr.bf16.mxu0 %v580
        %608 = vmatpush1.bf16.msra.mxu0 %v579
        %609 = vmatprep.subr.bf16.mxu0 %v576
        %610 = vmatpush1.bf16.msra.mxu0 %v575
        %611 = vmatprep.subr.bf16.mxu0 0
        %612 = vmatpush2.bf16.msra.mxu0 0
        %613 = vmatprep.subr.bf16.mxu0 0
        %614 = vmatpush2.bf16.msra.mxu0 0
        %615 = vmatprep.subr.bf16.mxu0 0
        %616 = vmatpush2.bf16.msra.mxu0 0
        %617 = vmatprep.subr.bf16.mxu0 0
        %618 = vmatpush2.bf16.msra.mxu0 0
        %619 = vmatprep.subr.bf16.mxu0 0
        %620 = vmatpush2.bf16.msra.mxu0 0
        %621 = vmatprep.subr.bf16.mxu0 0
        %622 = vmatpush2.bf16.msra.mxu0 0
        %623 = vmatprep.subr.bf16.mxu0 0
        %624 = vmatpush2.bf16.msra.mxu0 0
        %625 = vmatprep.subr.bf16.mxu0 0
        %626 = vmatpush2.bf16.msra.mxu0 0
        %627 = vmatprep.mubr.bf16.mxu0 0
        %628 = vmatmul.mubr.bf16.gmra.mxu0 %v593
        %v629 = vpop.f32.mrf.mxu0
        %v630 = vadd.f32 %v504, %v629
        %v631 = vpop.f32.mrf.mxu0
        %v632 = vadd.f32 %v506, %v631
        %v633 = vpop.f32.mrf.mxu0
        %v634 = vpop.f32.mrf.mxu0
        %635 = vdwg.mxu0
        %636 = vmatprep.subr.bf16.mxu0 0
        %637 = vmatpush1.bf16.msra.mxu0 0
        %638 = vmatprep.subr.bf16.mxu0 0
        %639 = vmatpush1.bf16.msra.mxu0 0
        %640 = vmatprep.subr.bf16.mxu0 0
        %641 = vmatpush1.bf16.msra.mxu0 0
        %642 = vmatprep.subr.bf16.mxu0 0
        %643 = vmatpush1.bf16.msra.mxu0 0
        %644 = vmatprep.subr.bf16.mxu0 0
        %645 = vmatpush1.bf16.msra.mxu0 0
        %646 = vmatprep.subr.bf16.mxu0 0
        %647 = vmatpush1.bf16.msra.mxu0 0
        %648 = vmatprep.subr.bf16.mxu0 %v582
        %649 = vmatpush1.bf16.msra.mxu0 %v581
        %650 = vmatprep.subr.bf16.mxu0 %v578
        %651 = vmatpush1.bf16.msra.mxu0 %v577
        %652 = vmatprep.subr.bf16.mxu0 0
        %653 = vmatpush2.bf16.msra.mxu0 0
        %654 = vmatprep.subr.bf16.mxu0 0
        %655 = vmatpush2.bf16.msra.mxu0 0
        %656 = vmatprep.subr.bf16.mxu0 0
        %657 = vmatpush2.bf16.msra.mxu0 0
        %658 = vmatprep.subr.bf16.mxu0 0
        %659 = vmatpush2.bf16.msra.mxu0 0
        %660 = vmatprep.subr.bf16.mxu0 0
        %661 = vmatpush2.bf16.msra.mxu0 0
        %662 = vmatprep.subr.bf16.mxu0 0
        %663 = vmatpush2.bf16.msra.mxu0 0
        %664 = vmatprep.subr.bf16.mxu0 0
        %665 = vmatpush2.bf16.msra.mxu0 0
        %666 = vmatprep.subr.bf16.mxu0 0
        %667 = vmatpush2.bf16.msra.mxu0 0
        %668 = vmatprep.mubr.bf16.mxu0 0
        %669 = vmatmul.mubr.bf16.gmra.mxu0 %v593
        %v670 = vpop.f32.mrf.mxu0
        %v671 = vadd.f32 %v545, %v670
        %v672 = vpop.f32.mrf.mxu0
        %v673 = vadd.f32 %v547, %v672
        %v674 = vpop.f32.mrf.mxu0
        %v675 = vpop.f32.mrf.mxu0
        %676 = vdwg.mxu0
        %v677 = vld [vmem:[%s3] sm:$0xf]
        %v679 = vlaneseq
        %v680 = vshrl.u32 %v679, 7
        %v681 = vsub.s32 0, %v680
        %v682 = vrot.slane %v677, %v681
        %v683 = vlaneseq
        %v684 = vshrl.u32 %v683, 7
        %v685 = vsub.s32 1, %v684
        %v686 = vrot.slane %v677, %v685
        %v687 = vlaneseq
        %v688 = vshrl.u32 %v687, 7
        %v689 = vsub.s32 2, %v688
        %v690 = vrot.slane %v677, %v689
        %v691 = vlaneseq
        %v692 = vshrl.u32 %v691, 7
        %v693 = vsub.s32 3, %v692
        %v694 = vrot.slane %v677, %v693
        %v699 = vadd.f32 %v630, %v682
        %v700 = vadd.f32 %v632, %v686
        %v701 = vadd.f32 %v671, %v690
        %v702 = vadd.f32 %v673, %v694
        %v703 = vxor.u32 %v699, 2147483648
        %v704 = vxor.u32 %v700, 2147483648
        %v705 = vxor.u32 %v701, 2147483648
        %v706 = vmul.f32 %v703, 1.442695
        %v707 = vpow.pop %v706
        %v708 = vmul.f32 %v704, 1.442695
        %v709 = vpow.pop %v708
        %v710 = vmul.f32 %v705, 1.442695
        %v711 = vpow.pop %v710
        %v712 = vadd.f32 %v707, 1.0
        %v713 = vadd.f32 %v709, 1.0
        %v714 = vadd.f32 %v711, 1.0
        %v715 = vrcp.pop %v712
        %v716 = vmul.f32 1.0, %v715
        %v717 = vrcp.pop %v713
        %v718 = vmul.f32 1.0, %v717
        %v719 = vrcp.pop %v714
        %v720 = vmul.f32 1.0, %v719
        %v721 = vtanh.pop %v702
        %v722 = vld [vmem:[#allocation3] sm:$0xff]
        %v723 = vmul.f32 %v718, %v722
        %v724 = vmul.f32 %v716, %v721
        %v725 = vadd.f32 %v723, %v724
        %v726 = vtanh.pop %v725
        %v727 = vmul.f32 %v720, %v726
        %728 = vst [vmem:[#allocation3] sm:$0xff] %v725
        %729 = vst [vmem:[#allocation2] sm:$0xff] %v727
        %v730 = vpack.c.bf16 %v727, %v727
        %731 = vst [vmem:[%s258] sm:$0xf] %v730
        %s732 = sand.u32 %s135, 1
        %s733 = scalar_lea.sflag [#allocation6], %s732
        %s734 = sand.u32 %s135, 1
        %s735 = smul.addr %s734, 4
        %s736 = scalar_lea.vmem [#allocation10], %s735
        // Predicated region
        $region53: #{tpu_custom_call.1} parent=35 // pred_check
          %p737 = pneg %p145
        $region54: #{tpu_custom_call.1} parent=35 // pred_check_branch
          %739 = sbr.rel (%p737) target = $region56
        $region55: #{tpu_custom_call.1} parent=35 // pred_region
          %s741 = ssub.s32 64, 64
          %742 = vsyncadd %s733, %s741
          %s743 = sadd.s32 %s26, %s27
          %s744 = smul.addr %s743, 64
          %s745 = scalar_lea.hbm %s4, %s744
          %s747 = sshll.u32 %s736, 4
          %s748 = int_to_ptr.vmem [resolvable:$true] %s747
          %750 = dma.vmem_to_hbm [thread:$0]  %s748, 64, %s745, %s733
        $region56: #{tpu_custom_call.1} parent=35 // pred_fallthru
          _
      $region36: #{tpu_custom_call.1} parent=5 // pred_fallthru
        _
      %p751 = scmp.le.s32.totalorder 2, %s17
      // Predicated region
      $region57: #{tpu_custom_call.1} parent=5 // pred_check
        %p752 = pneg %p751
      $region58: #{tpu_custom_call.1} parent=5 // pred_check_branch
        %754 = sbr.rel (%p752) target = $region60
      $region59: #{tpu_custom_call.1} parent=5 // pred_region
        %s755 = ssub.s32 %s17, 2
        // Predicated region
        $region61: #{tpu_custom_call.1} parent=59 // pred_check
          %p756 = pneg %p151
        $region62: #{tpu_custom_call.1} parent=59 // pred_check_branch
          %758 = sbr.rel (%p756) target = $region64
        $region63: #{tpu_custom_call.1} parent=59 // pred_region
          %s759 = sand.u32 %s136, 1
          %s760 = scalar_lea.sflag [#allocation6], %s759
          %s761 = sand.u32 %s136, 1
          %s762 = smul.addr %s761, 4
          %s763 = scalar_lea.vmem [#allocation10], %s762
          %764 = dma.done %s760, 64
        $region64: #{tpu_custom_call.1} parent=59 // pred_fallthru
          _
      $region60: #{tpu_custom_call.1} parent=5 // pred_fallthru
        _
    $region6: #{tpu_custom_call.1} parent=1 // loop_footer
      %s21 = sadd.s32 1, %s17
    $region7: #{tpu_custom_call.1} parent=1 // loop_footer_branch
      %16 = sbr.rel target = $region3
    $region8: #{tpu_custom_call.1} parent=1 // loop_exit
      _
    %765 = vsyncpa [#allocation5], 1
    %s766 = scalar_lea.sflag [#allocation5], 1
    %767 = vsyncpa %s766, 1
    %768 = vsyncpa [#allocation8], 1
    %769 = vsyncpa [#allocation6], 1
    %s770 = scalar_lea.sflag [#allocation6], 1
    %771 = vsyncpa %s770, 1

</llo_original>
